<compile_context>
chip_gen: v7x
topology: tpu7x:2x2x1
jax: 0.10.0
libtpu: 0.0.40
codegen_flags: <defaults>
</compile_context>

<pallas_src>
import functools

import numpy as np
import jax
import jax.numpy as jnp
from jax import lax
from jax.experimental import pallas as pl
from jax.experimental.pallas import tpu as pltpu


def _rel_shift_tile(bd):
    """Exact torch `_rel_shift` (zero-pad column + flat re-view) on one (Q, R) tile.

    shifted[p, :] == [bd[p, Q-1-p:], 0, bd[p+1, :Q-2-p]]   (pieces sum to R columns)

    Built from static 2-D slices + concatenates (robust Mosaic lowering).  Requires
    Q <= R (standard Transformer-XL usage: rlen == klen >= qlen).
    # TODO(synk): for large Q tiles replace the O(Q) unrolled shear with a vectorized
    # per-row-strided rotate (pltpu.roll with stride) to avoid code bloat.
    """
    Q, R = bd.shape
    rows = []
    for p in range(Q):
        pieces = [bd[p:p + 1, Q - 1 - p:R]]                 # (1, R - Q + 1 + p)
        if p < Q - 1:
            pieces.append(jnp.zeros((1, 1), bd.dtype))      # the injected zero
            tail = Q - 2 - p
            if tail > 0:                                    # spill-over from next query row
                pieces.append(bd[p + 1:p + 2, 0:tail])
        rows.append(jnp.concatenate(pieces, axis=1))        # (1, R)
    return jnp.concatenate(rows, axis=0)                    # (Q, R)


def _rel_attn_kernel(q_ref, k_ref, v_ref, r_ref, bu_ref, bv_ref, mask_ref,
                     out_ref, probs_ref, *, scale, clip, n_head):
    # q_ref: (Q, DH)   k_ref/v_ref: (K, DH)   r_ref: (R, DH)
    # bu_ref/bv_ref: (NH, DH)   mask_ref: (Q, K) float (1.0 == masked)
    # out_ref: (Q, DH)          probs_ref: (Q, K)  -- resident across the head axis
    n = pl.program_id(1)

    bu = bu_ref[pl.ds(n, 1), :]                              # (1, DH)
    bv = bv_ref[pl.ds(n, 1), :]                              # (1, DH)

    q = q_ref[...]                                           # (Q, DH) f32
    qu = (q + bu).astype(jnp.bfloat16)
    qv = (q + bv).astype(jnp.bfloat16)
    kb = k_ref[...].astype(jnp.bfloat16)
    rb = r_ref[...].astype(jnp.bfloat16)

    dn = (((1,), (1,)), ((), ()))                            # contract d_head (== x @ y.T)
    ac = lax.dot_general(qu, kb, dn, preferred_element_type=jnp.float32)   # (Q, K)
    bd = lax.dot_general(qv, rb, dn, preferred_element_type=jnp.float32)   # (Q, R)
    bd = _rel_shift_tile(bd)                                               # (Q, R == K)

    score = (ac + bd) * scale
    if clip > 0:
        score = clip * jnp.tanh(score)

    # per-head softmax over keys + attention output
    m = jnp.max(score, axis=-1, keepdims=True)
    e = jnp.exp(score - m)
    w = e * pl.reciprocal(jnp.sum(e, axis=-1, keepdims=True), approx=True)
    # TODO(synk): internal_drop > 0 (dropout on `w`) not implemented (disabled path of module).
    out_ref[...] = jnp.dot(w.astype(jnp.bfloat16), v_ref[...].astype(jnp.bfloat16),
                           preferred_element_type=jnp.float32).astype(out_ref.dtype)

    # head-mean logits -> masked softmax (`probs`).  probs_ref is the VMEM-resident
    # accumulator across the innermost ("arbitrary") head grid axis.
    @pl.when(n == 0)
    def _init():
        probs_ref[...] = score

    @pl.when(n != 0)
    def _accumulate():
        probs_ref[...] = probs_ref[...] + score

    @pl.when(n == n_head - 1)
    def _finalize():
        logits = probs_ref[...] * (1.0 / n_head)
        # NOTE: a fully-masked row yields all -inf -> NaN, same as the torch module.
        logits = jnp.where(mask_ref[...] > 0.5, -jnp.inf, logits)
        m2 = jnp.max(logits, axis=-1, keepdims=True)
        e2 = jnp.exp(logits - m2)
        probs_ref[...] = e2 * pl.reciprocal(jnp.sum(e2, axis=-1, keepdims=True),
                                            approx=True)


# ------------------------------------- wrapper ------------------------------------------
def rel_multi_head_attn(q, k, v, r, bias_u, bias_v, mask, *, n_head, clip):
    """Inputs in PyTorch layout: q (Q,B,H), k/v (K,B,H), r (R,1,H),
    bias_u/bias_v (nh, dh), mask (Q,K,B) bool.  Returns (out (Q,B,H), probs (Q,K,B))."""
    qlen, bsz, H = q.shape
    klen = k.shape[0]
    rlen = r.shape[0]
    dh = H // n_head
    scale = 1.0 / (dh ** 0.5)
    assert rlen == klen, "score = AC + BD requires rlen == klen"
    assert qlen <= rlen, "in-kernel rel_shift assumes qlen <= rlen (standard TXL usage)"

    # Relayout to head-major (B, NH, seq, DH): each grid step's BlockSpec then pulls a
    # single aligned tile whose last two block dims equal the full array dims (keeps the
    # (8,128) block constraint satisfied even for small d_head).
    q4 = q.reshape(qlen, bsz, n_head, dh).transpose(1, 2, 0, 3)
    k4 = k.reshape(klen, bsz, n_head, dh).transpose(1, 2, 0, 3)
    v4 = v.reshape(klen, bsz, n_head, dh).transpose(1, 2, 0, 3)
    r3 = r.reshape(rlen, n_head, dh).transpose(1, 0, 2)            # (NH, R, DH)
    mask_f = mask.astype(jnp.float32).transpose(2, 0, 1)           # (B, Q, K)

    kernel = functools.partial(_rel_attn_kernel, scale=scale, clip=clip, n_head=n_head)
    out_bnqd, probs_bqk = pl.pallas_call(
        kernel,
        grid=(bsz, n_head),
        in_specs=[
            pl.BlockSpec((None, None, qlen, dh), lambda b, n: (b, n, 0, 0)),   # q
            pl.BlockSpec((None, None, klen, dh), lambda b, n: (b, n, 0, 0)),   # k
            pl.BlockSpec((None, None, klen, dh), lambda b, n: (b, n, 0, 0)),   # v
            pl.BlockSpec((None, rlen, dh), lambda b, n: (n, 0, 0)),            # r
            pl.BlockSpec((n_head, dh), lambda b, n: (0, 0)),                   # bias_u
            pl.BlockSpec((n_head, dh), lambda b, n: (0, 0)),                   # bias_v
            pl.BlockSpec((None, qlen, klen), lambda b, n: (b, 0, 0)),          # mask
        ],
        out_specs=[
            pl.BlockSpec((None, None, qlen, dh), lambda b, n: (b, n, 0, 0)),   # out
            pl.BlockSpec((None, qlen, klen), lambda b, n: (b, 0, 0)),          # probs
        ],
        out_shape=[
            jax.ShapeDtypeStruct((bsz, n_head, qlen, dh), jnp.float32),
            jax.ShapeDtypeStruct((bsz, qlen, klen), jnp.float32),
        ],
        compiler_params=pltpu.CompilerParams(
            dimension_semantics=("parallel", "arbitrary")),
    )(q4, k4, v4, r3, bias_u, bias_v, mask_f)

    # back to torch layout
    out = out_bnqd.transpose(2, 0, 1, 3).reshape(qlen, bsz, H)     # (Q, B, H)
    probs = probs_bqk.transpose(1, 2, 0)                           # (Q, K, B)
    return out, probs


# ---------------------------- pure-JAX reference (torch port) ---------------------------
def ref_forward(q, k, v, r, bias_u, bias_v, mask, n_head, clip):
    qlen, bsz, H = q.shape
    klen, rlen = k.shape[0], r.shape[0]
    dh = H // n_head
    scale = 1.0 / (dh ** 0.5)
    q4 = q.reshape(qlen, bsz, n_head, dh)
    k4 = k.reshape(klen, bsz, n_head, dh)
    v4 = v.reshape(klen, bsz, n_head, dh)
    r3 = r.reshape(rlen, n_head, dh)
    AC = jnp.einsum('ibnd,jbnd->ijbn', q4 + bias_u, k4)
    BD = jnp.einsum('ibnd,jnd->ijbn', q4 + bias_v, r3)
    zero = jnp.zeros((qlen, 1, bsz, n_head), BD.dtype)
    BDp = jnp.concatenate([zero, BD], axis=1).reshape(rlen + 1, qlen, bsz, n_head)
    BD = BDp[1:].reshape(qlen, rlen, bsz, n_head)
    score = (AC + BD) * scale
    if clip > 0:
        score = clip * jnp.tanh(score)
    weight = jax.nn.softmax(score, axis=1)
    logits = score.mean(-1)
    logits = jnp.where(mask, -jnp.inf, logits)
    probs = jax.nn.softmax(logits, axis=1)
    out = jnp.einsum('ijbn,jbnd->ibnd', weight, v4).reshape(qlen, bsz, H)
    return out, probs


if __name__ == "__main__":
    n_head, d_model = 4, 32
    d_head = d_model // n_head
    qlen, klen, rlen, bsz = 4, 8, 8, 2
    clip = 5.0
    # internal_drop = -1 -> no self.drop; torch's try/except makes dropout a no-op.

    key = jax.random.PRNGKey(0)
    ks = jax.random.split(key, 7)
    q = jax.random.normal(ks[0], (qlen, bsz, d_model), jnp.float32)
    k = jax.random.normal(ks[1], (klen, bsz, d_model), jnp.float32)
    v = jax.random.normal(ks[2], (klen, bsz, d_model), jnp.float32)
    r = jax.random.normal(ks[3], (rlen, 1, d_model), jnp.float32)
    bias_u = 0.02 * jax.random.normal(ks[4], (n_head, d_head), jnp.float32)
    bias_v = 0.02 * jax.random.normal(ks[5], (n_head, d_head), jnp.float32)
    mask = jax.random.uniform(ks[6], (qlen, klen, bsz)) < 0.3
    mask = mask.at[:, 0, :].set(False)   # keep at least one unmasked key per row

    out, probs = rel_multi_head_attn(q, k, v, r, bias_u, bias_v, mask,
                                     n_head=n_head, clip=clip)
    jax.block_until_ready((out, probs))

    out_r, probs_r = ref_forward(q, k, v, r, bias_u, bias_v, mask, n_head, clip)
    assert out.shape == (qlen, bsz, d_model)
    assert probs.shape == (qlen, klen, bsz)
    # Tolerance sized for bf16 MXU operands (f32 accumulation) + approx-reciprocal softmax.
    np.testing.assert_allclose(np.asarray(out), np.asarray(out_r), rtol=5e-2, atol=5e-2)
    np.testing.assert_allclose(np.asarray(probs), np.asarray(probs_r), rtol=5e-2, atol=5e-2)
    print("KERNEL_OK")
</pallas_src>

<mosaic_0001>
module attributes {stable_mosaic.version = 11 : i64} {
  func.func @_rel_attn_kernel(%arg0: i32, %arg1: i32, %arg2: memref<1x1x4x8xf32, #tpu.memory_space<vmem>>, %arg3: memref<1x1x8x8xf32, #tpu.memory_space<vmem>>, %arg4: memref<1x1x8x8xf32, #tpu.memory_space<vmem>>, %arg5: memref<1x8x8xf32, #tpu.memory_space<vmem>>, %arg6: memref<4x8xf32, #tpu.memory_space<vmem>>, %arg7: memref<4x8xf32, #tpu.memory_space<vmem>>, %arg8: memref<1x4x8xf32, #tpu.memory_space<vmem>>, %arg9: memref<1x1x4x8xf32, #tpu.memory_space<vmem>>, %arg10: memref<1x4x8xf32, #tpu.memory_space<vmem>>) attributes {dimension_semantics = [#tpu.dimension_semantics<parallel>, #tpu.dimension_semantics<arbitrary>], iteration_bounds = array<i64: 2, 4>, scalar_prefetch = 0 : i64, scratch_operands = 0 : i64, tpu.core_type = #tpu.core_type<tc>, window_params = [{transform_indices = @transform_0, window_bounds = array<i64: 1, 1, 4, 8>}, {transform_indices = @transform_1, window_bounds = array<i64: 1, 1, 8, 8>}, {transform_indices = @transform_2, window_bounds = array<i64: 1, 1, 8, 8>}, {transform_indices = @transform_3, window_bounds = array<i64: 1, 8, 8>}, {pipeline_mode = #tpu.pipeline_mode<synchronous>, transform_indices = @transform_4, window_bounds = array<i64: 4, 8>}, {pipeline_mode = #tpu.pipeline_mode<synchronous>, transform_indices = @transform_5, window_bounds = array<i64: 4, 8>}, {transform_indices = @transform_6, window_bounds = array<i64: 1, 4, 8>}, {transform_indices = @transform_7, window_bounds = array<i64: 1, 1, 4, 8>}, {transform_indices = @transform_8, window_bounds = array<i64: 1, 4, 8>}]} {
    %0 = arith.index_cast %arg1 : i32 to index
    %c0 = arith.constant 0 : index
    %1 = vector.load %arg6[%0, %c0] : memref<4x8xf32, #tpu.memory_space<vmem>>, vector<1x8xf32>
    %2 = arith.index_cast %arg1 : i32 to index
    %c0_0 = arith.constant 0 : index
    %3 = vector.load %arg7[%2, %c0_0] : memref<4x8xf32, #tpu.memory_space<vmem>>, vector<1x8xf32>
    %c0_1 = arith.constant 0 : index
    %c0_2 = arith.constant 0 : index
    %c0_3 = arith.constant 0 : index
    %c0_4 = arith.constant 0 : index
    %4 = vector.load %arg2[%c0_1, %c0_2, %c0_3, %c0_4] : memref<1x1x4x8xf32, #tpu.memory_space<vmem>>, vector<1x1x4x8xf32>
    %5 = vector.shape_cast %4 : vector<1x1x4x8xf32> to vector<4x8xf32>
    %6 = vector.broadcast %1 : vector<1x8xf32> to vector<4x8xf32>
    %7 = arith.addf %5, %6 : vector<4x8xf32>
    %8 = arith.truncf %7 : vector<4x8xf32> to vector<4x8xbf16>
    %9 = vector.broadcast %3 : vector<1x8xf32> to vector<4x8xf32>
    %10 = arith.addf %5, %9 : vector<4x8xf32>
    %11 = arith.truncf %10 : vector<4x8xf32> to vector<4x8xbf16>
    %c0_5 = arith.constant 0 : index
    %c0_6 = arith.constant 0 : index
    %c0_7 = arith.constant 0 : index
    %c0_8 = arith.constant 0 : index
    %12 = vector.load %arg3[%c0_5, %c0_6, %c0_7, %c0_8] : memref<1x1x8x8xf32, #tpu.memory_space<vmem>>, vector<1x1x8x8xf32>
    %13 = vector.shape_cast %12 : vector<1x1x8x8xf32> to vector<8x8xf32>
    %14 = arith.truncf %13 : vector<8x8xf32> to vector<8x8xbf16>
    %c0_9 = arith.constant 0 : index
    %c0_10 = arith.constant 0 : index
    %c0_11 = arith.constant 0 : index
    %15 = vector.load %arg5[%c0_9, %c0_10, %c0_11] : memref<1x8x8xf32, #tpu.memory_space<vmem>>, vector<1x8x8xf32>
    %16 = vector.shape_cast %15 : vector<1x8x8xf32> to vector<8x8xf32>
    %17 = arith.truncf %16 : vector<8x8xf32> to vector<8x8xbf16>
    %cst = arith.constant dense<0.000000e+00> : vector<4x8xf32>
    %18 = tpu.matmul %8, %14, %cst {dimension_numbers = #tpu.dot_dimension_numbers<[1], [1], [0], [0], [0, 0, 1, 0], [], []>} : vector<4x8xbf16>, vector<8x8xbf16>, vector<4x8xf32> -> vector<4x8xf32>
    %cst_12 = arith.constant dense<0.000000e+00> : vector<4x8xf32>
    %19 = tpu.matmul %11, %17, %cst_12 {dimension_numbers = #tpu.dot_dimension_numbers<[1], [1], [0], [0], [0, 0, 1, 0], [], []>} : vector<4x8xbf16>, vector<8x8xbf16>, vector<4x8xf32> -> vector<4x8xf32>
    %20 = vector.extract_strided_slice %19 {offsets = [0, 3], sizes = [1, 5], strides = [1, 1]} : vector<4x8xf32> to vector<1x5xf32>
    %cst_13 = arith.constant 0.000000e+00 : f32
    %21 = vector.broadcast %cst_13 : f32 to vector<1x1xf32>
    %22 = vector.extract_strided_slice %19 {offsets = [1, 0], sizes = [1, 2], strides = [1, 1]} : vector<4x8xf32> to vector<1x2xf32>
    %23 = tpu.concatenate %20, %21, %22 in 1 : vector<1x5xf32>, vector<1x1xf32>, vector<1x2xf32> -> vector<1x8xf32>
    %24 = vector.extract_strided_slice %19 {offsets = [1, 2], sizes = [1, 6], strides = [1, 1]} : vector<4x8xf32> to vector<1x6xf32>
    %cst_14 = arith.constant 0.000000e+00 : f32
    %25 = vector.broadcast %cst_14 : f32 to vector<1x1xf32>
    %26 = vector.extract_strided_slice %19 {offsets = [2, 0], sizes = [1, 1], strides = [1, 1]} : vector<4x8xf32> to vector<1x1xf32>
    %27 = tpu.concatenate %24, %25, %26 in 1 : vector<1x6xf32>, vector<1x1xf32>, vector<1x1xf32> -> vector<1x8xf32>
    %28 = vector.extract_strided_slice %19 {offsets = [2, 1], sizes = [1, 7], strides = [1, 1]} : vector<4x8xf32> to vector<1x7xf32>
    %cst_15 = arith.constant 0.000000e+00 : f32
    %29 = vector.broadcast %cst_15 : f32 to vector<1x1xf32>
    %30 = tpu.concatenate %28, %29 in 1 : vector<1x7xf32>, vector<1x1xf32> -> vector<1x8xf32>
    %31 = vector.extract_strided_slice %19 {offsets = [3, 0], sizes = [1, 8], strides = [1, 1]} : vector<4x8xf32> to vector<1x8xf32>
    %32 = tpu.concatenate %23, %27, %30, %31 in 0 : vector<1x8xf32>, vector<1x8xf32>, vector<1x8xf32>, vector<1x8xf32> -> vector<4x8xf32>
    %33 = arith.addf %18, %32 : vector<4x8xf32>
    %cst_16 = arith.constant 0.353553385 : f32
    %34 = vector.broadcast %cst_16 : f32 to vector<4x8xf32>
    %35 = arith.mulf %33, %34 : vector<4x8xf32>
    %36 = math.tanh %35 : vector<4x8xf32>
    %cst_17 = arith.constant 5.000000e+00 : f32
    %37 = vector.broadcast %cst_17 : f32 to vector<4x8xf32>
    %38 = arith.mulf %37, %36 : vector<4x8xf32>
    %cst_18 = arith.constant dense<0xFF800000> : vector<4xf32>
    %39 = vector.multi_reduction <maximumf>, %38, %cst_18 [1] : vector<4x8xf32> to vector<4xf32>
    %40 = vector.shape_cast %39 : vector<4xf32> to vector<4x1xf32>
    %41 = vector.broadcast %40 : vector<4x1xf32> to vector<4x8xf32>
    %42 = arith.subf %38, %41 : vector<4x8xf32>
    %43 = math.exp %42 : vector<4x8xf32>
    %cst_19 = arith.constant dense<0.000000e+00> : vector<4xf32>
    %44 = vector.multi_reduction <add>, %43, %cst_19 [1] : vector<4x8xf32> to vector<4xf32>
    %45 = vector.shape_cast %44 : vector<4xf32> to vector<4x1xf32>
    %46 = tpu.reciprocal %45 {approx = true} : vector<4x1xf32> -> vector<4x1xf32>
    %47 = vector.broadcast %46 : vector<4x1xf32> to vector<4x8xf32>
    %48 = arith.mulf %43, %47 : vector<4x8xf32>
    %49 = arith.truncf %48 : vector<4x8xf32> to vector<4x8xbf16>
    %c0_20 = arith.constant 0 : index
    %c0_21 = arith.constant 0 : index
    %c0_22 = arith.constant 0 : index
    %c0_23 = arith.constant 0 : index
    %50 = vector.load %arg4[%c0_20, %c0_21, %c0_22, %c0_23] : memref<1x1x8x8xf32, #tpu.memory_space<vmem>>, vector<1x1x8x8xf32>
    %51 = vector.shape_cast %50 : vector<1x1x8x8xf32> to vector<8x8xf32>
    %52 = arith.truncf %51 : vector<8x8xf32> to vector<8x8xbf16>
    %cst_24 = arith.constant dense<0.000000e+00> : vector<4x8xf32>
    %53 = tpu.matmul %49, %52, %cst_24 {dimension_numbers = #tpu.dot_dimension_numbers<[1], [0], [0], [1], [0, 0, 1, 1], [], []>} : vector<4x8xbf16>, vector<8x8xbf16>, vector<4x8xf32> -> vector<4x8xf32>
    %c0_25 = arith.constant 0 : index
    %c0_26 = arith.constant 0 : index
    %c0_27 = arith.constant 0 : index
    %c0_28 = arith.constant 0 : index
    %54 = vector.load %arg9[%c0_25, %c0_26, %c0_27, %c0_28] : memref<1x1x4x8xf32, #tpu.memory_space<vmem>>, vector<1x1x4x8xf32>
    %55 = vector.shape_cast %54 : vector<1x1x4x8xf32> to vector<4x8xf32>
    %56 = vector.shape_cast %53 : vector<4x8xf32> to vector<1x1x4x8xf32>
    tpu.vector_store %arg9[%c0_25, %c0_26, %c0_27, %c0_28], %56 {strides = array<i32>} : memref<1x1x4x8xf32, #tpu.memory_space<vmem>>, vector<1x1x4x8xf32>,
    %c0_i32 = arith.constant 0 : i32
    %57 = arith.cmpi eq, %arg1, %c0_i32 : i32
    %58 = arith.extui %57 : i1 to i32
    %c0_i32_29 = arith.constant 0 : i32
    %59 = arith.cmpi ne, %58, %c0_i32_29 : i32
    scf.if %59 {
      %c0_33 = arith.constant 0 : index
      %c0_34 = arith.constant 0 : index
      %c0_35 = arith.constant 0 : index
      %66 = vector.load %arg10[%c0_33, %c0_34, %c0_35] : memref<1x4x8xf32, #tpu.memory_space<vmem>>, vector<1x4x8xf32>
      %67 = vector.shape_cast %66 : vector<1x4x8xf32> to vector<4x8xf32>
      %68 = vector.shape_cast %38 : vector<4x8xf32> to vector<1x4x8xf32>
      tpu.vector_store %arg10[%c0_33, %c0_34, %c0_35], %68 {strides = array<i32>} : memref<1x4x8xf32, #tpu.memory_space<vmem>>, vector<1x4x8xf32>,
    } else {
    }
    %c0_i32_30 = arith.constant 0 : i32
    %60 = arith.cmpi ne, %arg1, %c0_i32_30 : i32
    %61 = arith.extui %60 : i1 to i32
    %c0_i32_31 = arith.constant 0 : i32
    %62 = arith.cmpi ne, %61, %c0_i32_31 : i32
    scf.if %62 {
      %c0_33 = arith.constant 0 : index
      %c0_34 = arith.constant 0 : index
      %c0_35 = arith.constant 0 : index
      %66 = vector.load %arg10[%c0_33, %c0_34, %c0_35] : memref<1x4x8xf32, #tpu.memory_space<vmem>>, vector<1x4x8xf32>
      %67 = vector.shape_cast %66 : vector<1x4x8xf32> to vector<4x8xf32>
      %68 = arith.addf %67, %38 : vector<4x8xf32>
      %c0_36 = arith.constant 0 : index
      %c0_37 = arith.constant 0 : index
      %c0_38 = arith.constant 0 : index
      %69 = vector.load %arg10[%c0_36, %c0_37, %c0_38] : memref<1x4x8xf32, #tpu.memory_space<vmem>>, vector<1x4x8xf32>
      %70 = vector.shape_cast %69 : vector<1x4x8xf32> to vector<4x8xf32>
      %71 = vector.shape_cast %68 : vector<4x8xf32> to vector<1x4x8xf32>
      tpu.vector_store %arg10[%c0_36, %c0_37, %c0_38], %71 {strides = array<i32>} : memref<1x4x8xf32, #tpu.memory_space<vmem>>, vector<1x4x8xf32>,
    } else {
    }
    %c3_i32 = arith.constant 3 : i32
    %63 = arith.cmpi eq, %arg1, %c3_i32 : i32
    %64 = arith.extui %63 : i1 to i32
    %c0_i32_32 = arith.constant 0 : i32
    %65 = arith.cmpi ne, %64, %c0_i32_32 : i32
    scf.if %65 {
      %c0_33 = arith.constant 0 : index
      %c0_34 = arith.constant 0 : index
      %c0_35 = arith.constant 0 : index
      %66 = vector.load %arg10[%c0_33, %c0_34, %c0_35] : memref<1x4x8xf32, #tpu.memory_space<vmem>>, vector<1x4x8xf32>
      %67 = vector.shape_cast %66 : vector<1x4x8xf32> to vector<4x8xf32>
      %cst_36 = arith.constant 2.500000e-01 : f32
      %68 = vector.broadcast %cst_36 : f32 to vector<4x8xf32>
      %69 = arith.mulf %67, %68 : vector<4x8xf32>
      %c0_37 = arith.constant 0 : index
      %c0_38 = arith.constant 0 : index
      %c0_39 = arith.constant 0 : index
      %70 = vector.load %arg8[%c0_37, %c0_38, %c0_39] : memref<1x4x8xf32, #tpu.memory_space<vmem>>, vector<1x4x8xf32>
      %71 = vector.shape_cast %70 : vector<1x4x8xf32> to vector<4x8xf32>
      %cst_40 = arith.constant 5.000000e-01 : f32
      %72 = vector.broadcast %cst_40 : f32 to vector<4x8xf32>
      %73 = arith.cmpf ogt, %71, %72 : vector<4x8xf32>
      %cst_41 = arith.constant 0xFF800000 : f32
      %74 = vector.broadcast %cst_41 : f32 to vector<4x8xf32>
      %75 = arith.select %73, %74, %69 : vector<4x8xi1>, vector<4x8xf32>
      %cst_42 = arith.constant dense<0xFF800000> : vector<4xf32>
      %76 = vector.multi_reduction <maximumf>, %75, %cst_42 [1] : vector<4x8xf32> to vector<4xf32>
      %77 = vector.shape_cast %76 : vector<4xf32> to vector<4x1xf32>
      %78 = vector.broadcast %77 : vector<4x1xf32> to vector<4x8xf32>
      %79 = arith.subf %75, %78 : vector<4x8xf32>
      %80 = math.exp %79 : vector<4x8xf32>
      %cst_43 = arith.constant dense<0.000000e+00> : vector<4xf32>
      %81 = vector.multi_reduction <add>, %80, %cst_43 [1] : vector<4x8xf32> to vector<4xf32>
      %82 = vector.shape_cast %81 : vector<4xf32> to vector<4x1xf32>
      %83 = tpu.reciprocal %82 {approx = true} : vector<4x1xf32> -> vector<4x1xf32>
      %84 = vector.broadcast %83 : vector<4x1xf32> to vector<4x8xf32>
      %85 = arith.mulf %80, %84 : vector<4x8xf32>
      %c0_44 = arith.constant 0 : index
      %c0_45 = arith.constant 0 : index
      %c0_46 = arith.constant 0 : index
      %86 = vector.load %arg10[%c0_44, %c0_45, %c0_46] : memref<1x4x8xf32, #tpu.memory_space<vmem>>, vector<1x4x8xf32>
      %87 = vector.shape_cast %86 : vector<1x4x8xf32> to vector<4x8xf32>
      %88 = vector.shape_cast %85 : vector<4x8xf32> to vector<1x4x8xf32>
      tpu.vector_store %arg10[%c0_44, %c0_45, %c0_46], %88 {strides = array<i32>} : memref<1x4x8xf32, #tpu.memory_space<vmem>>, vector<1x4x8xf32>,
    } else {
    }
    return
  }
  func.func @transform_0(%arg0: i32, %arg1: i32) -> (i32, i32, i32, i32) {
    %c0_i32 = arith.constant 0 : i32
    %c0_i32_0 = arith.constant 0 : i32
    %c0_i32_1 = arith.constant 0 : i32
    return %arg0, %arg1, %c0_i32, %c0_i32_0 : i32, i32, i32, i32
  }
  func.func @transform_1(%arg0: i32, %arg1: i32) -> (i32, i32, i32, i32) {
    %c0_i32 = arith.constant 0 : i32
    %c0_i32_0 = arith.constant 0 : i32
    %c0_i32_1 = arith.constant 0 : i32
    return %arg0, %arg1, %c0_i32, %c0_i32_0 : i32, i32, i32, i32
  }
  func.func @transform_2(%arg0: i32, %arg1: i32) -> (i32, i32, i32, i32) {
    %c0_i32 = arith.constant 0 : i32
    %c0_i32_0 = arith.constant 0 : i32
    %c0_i32_1 = arith.constant 0 : i32
    return %arg0, %arg1, %c0_i32, %c0_i32_0 : i32, i32, i32, i32
  }
  func.func @transform_3(%arg0: i32, %arg1: i32) -> (i32, i32, i32) {
    %c0_i32 = arith.constant 0 : i32
    %c0_i32_0 = arith.constant 0 : i32
    %c0_i32_1 = arith.constant 0 : i32
    return %arg1, %c0_i32, %c0_i32_0 : i32, i32, i32
  }
  func.func @transform_4(%arg0: i32, %arg1: i32) -> (i32, i32) {
    %c0_i32 = arith.constant 0 : i32
    %c0_i32_0 = arith.constant 0 : i32
    %c0_i32_1 = arith.constant 0 : i32
    return %c0_i32, %c0_i32_0 : i32, i32
  }
  func.func @transform_5(%arg0: i32, %arg1: i32) -> (i32, i32) {
    %c0_i32 = arith.constant 0 : i32
    %c0_i32_0 = arith.constant 0 : i32
    %c0_i32_1 = arith.constant 0 : i32
    return %c0_i32, %c0_i32_0 : i32, i32
  }
  func.func @transform_6(%arg0: i32, %arg1: i32) -> (i32, i32, i32) {
    %c0_i32 = arith.constant 0 : i32
    %c0_i32_0 = arith.constant 0 : i32
    %c0_i32_1 = arith.constant 0 : i32
    return %arg0, %c0_i32, %c0_i32_0 : i32, i32, i32
  }
  func.func @transform_7(%arg0: i32, %arg1: i32) -> (i32, i32, i32, i32) {
    %c0_i32 = arith.constant 0 : i32
    %c0_i32_0 = arith.constant 0 : i32
    %c0_i32_1 = arith.constant 0 : i32
    return %arg0, %arg1, %c0_i32, %c0_i32_0 : i32, i32, i32, i32
  }
  func.func @transform_8(%arg0: i32, %arg1: i32) -> (i32, i32, i32) {
    %c0_i32 = arith.constant 0 : i32
    %c0_i32_0 = arith.constant 0 : i32
    %c0_i32_1 = arith.constant 0 : i32
    return %arg0, %c0_i32, %c0_i32_0 : i32, i32, i32
  }
}

</mosaic_0001>

<llo_original>
// kernel: tpu_custom_call.1
$region0: #{tpu_custom_call.1}
  #allocation0 [shape = 'u32[]', space=smem, size = 0x4, offset = 0x4, fixed_abs, tag = 'smem constant byte address 0x4 - core index']
  #allocation1 [shape = 'u32[144,128]{1,0:T(1,128)}', space=vmem, size = 0x12000, scoped, tag = 'internal scratch']
  %s0 = inlined_call_operand.hbm [shape: f32[2,4,4,8], index: 0, kind: input, shape index: {}]
  %s1 = inlined_call_operand.hbm [shape: f32[2,4,8,8], index: 1, kind: input, shape index: {}]
  %s2 = inlined_call_operand.hbm [shape: f32[2,4,8,8], index: 2, kind: input, shape index: {}]
  %s3 = inlined_call_operand.hbm [shape: f32[4,8,8], index: 3, kind: input, shape index: {}]
  %s4 = inlined_call_operand.vmem [shape: f32[4,8], index: 4, kind: input, shape index: {}]
  %s5 = inlined_call_operand.vmem [shape: f32[4,8], index: 5, kind: input, shape index: {}]
  %s6 = inlined_call_operand.vmem [shape: f32[2,4,8], index: 6, kind: input, shape index: {}]
  %s7 = inlined_call_operand.hbm [shape: f32[2,4,4,8], index: 7, kind: output, shape index: {0}]
  %s8 = inlined_call_operand.hbm [shape: f32[2,4,8], index: 8, kind: output, shape index: {1}]
  %9 = xla_tuple %s7, %s8
  %s10 = sld [smem:[#allocation0]]
  $region97: #{tpu_custom_call.1} parent=0
    _
  %s12 = ssub.s32 1, %s10
  %s13 = scalar_select 0, %s12, %s10
  $region1: #{tpu_custom_call.1} parent=0
    #allocation2 [shape = 'u8[4096]{0}', space=vmem, size = 0x1000, scoped, tag = 'input window, operand 0']
    #allocation3 [shape = 's32[2]{0}', space=sflag, size = 0x8, scoped, tag = 'scoped memory for tpu_custom_call.1']
    #allocation4 [shape = 's32[2]{0}', space=sflag, size = 0x8, scoped, tag = 'scoped memory for tpu_custom_call.1']
    #allocation5 [shape = 'u8[8192]{0}', space=vmem, size = 0x2000, scoped, tag = 'input window, operand 1']
    #allocation6 [shape = 's32[2]{0}', space=sflag, size = 0x8, scoped, tag = 'scoped memory for tpu_custom_call.1']
    #allocation7 [shape = 'u8[8192]{0}', space=vmem, size = 0x2000, scoped, tag = 'input window, operand 2']
    #allocation8 [shape = 'u8[8192]{0}', space=vmem, size = 0x2000, scoped, tag = 'input window, operand 3']
    #allocation9 [shape = 's32[2]{0}', space=sflag, size = 0x8, scoped, tag = 'scoped memory for tpu_custom_call.1']
    #allocation10 [shape = 'u8[4096]{0}', space=vmem, size = 0x1000, scoped, tag = 'output window, operand 0']
    #allocation11 [shape = 'u8[4096]{0}', space=vmem, size = 0x1000, scoped, tag = 'output window, operand 1']
    #allocation12 [shape = 's32[2]{0}', space=sflag, size = 0x8, scoped, tag = 'scoped memory for tpu_custom_call.1']
    %14 = vsyncpa [#allocation3], 0
    %s15 = scalar_lea.sflag [#allocation3], 1
    %16 = vsyncpa %s15, 0
    %17 = vsyncpa [#allocation6], 0
    %s18 = scalar_lea.sflag [#allocation6], 1
    %19 = vsyncpa %s18, 0
    %20 = vsyncpa [#allocation9], 0
    %s21 = scalar_lea.sflag [#allocation9], 1
    %22 = vsyncpa %s21, 0
    %23 = vsyncpa [#allocation4], 0
    %s24 = scalar_lea.sflag [#allocation4], 1
    %25 = vsyncpa %s24, 0
    %26 = vsyncpa [#allocation12], 0
    %s27 = scalar_lea.sflag [#allocation12], 1
    %28 = vsyncpa %s27, 0
    loop: start=0, step=1, limit=10
    $region2: #{tpu_custom_call.1} parent=1 // loop_pre_header
      _
    $region3: #{tpu_custom_call.1} parent=1 // loop_header
      %s30 = sphi 0, %s34
      %p31 = scmp.ge.s32.totalorder %s30, 10
      %s37 = sphi 0, %s49
      %s38 = sphi 0, %s45
      %s39 = sphi 0, %s37
      %s40 = sphi 0, %s38
      %s41 = sphi 0, %s39
      %s42 = sphi 0, %s40
      %s54 = sphi 0, %s56
      %s57 = sphi 0, %s54
      %s58 = sphi 0, %s57
      %s74 = sphi 0, %s58
      %s82 = sphi 0, %s84
      %s85 = sphi 0, %s82
      %s86 = sphi 0, %s85
      %s102 = sphi 0, %s86
      %s110 = sphi 0, %s112
      %s113 = sphi 0, %s110
      %s114 = sphi 0, %s113
      %s130 = sphi 0, %s114
      %s136 = sphi 0, %s138
      %s139 = sphi 0, %s136
      %s140 = sphi 0, %s139
      %s156 = sphi 0, %s140
      %s160 = sphi 0, %s160
      %s162 = sphi 0, %s160
      %s163 = sphi 0, %s162
      %s177 = sphi 0, %s163
      %s181 = sphi 0, %s181
      %s183 = sphi 0, %s181
      %s184 = sphi 0, %s183
      %s198 = sphi 0, %s184
      %s204 = sphi 0, %s206
      %s207 = sphi 0, %s204
      %s208 = sphi 0, %s207
      %s224 = sphi 0, %s208
      %s232 = sphi 0, %s234
      %s235 = sphi 0, %s232
      %s236 = sphi 0, %s235
      %s252 = sphi 0, %s236
      %s258 = sphi 0, %s260
      %s261 = sphi 0, %s258
      %s262 = sphi 0, %s261
      %s278 = sphi 0, %s262
    $region4: #{tpu_custom_call.1} parent=1 // loop_header_branch
      %33 = sbr.rel (%p31) target = $region8
    $region5: #{tpu_custom_call.1} parent=1 // loop_body
      %s35 = ssub.s32 %s30, 1
      %s36 = ssub.s32 %s30, 2
      %s43 = sadd.s32 1, %s38
      %p44 = scmp.ge.s32.totalorder %s43, 4
      %s45 = scalar_select %p44, 0, %s43
      %s46 = sadd.s32 1, %s37
      %s47 = scalar_select %p44, %s46, %s37
      %p48 = scmp.ge.s32.totalorder %s47, 2
      %s49 = scalar_select %p48, 0, %s47
      %s50 = ssub.s32 %s37, %s49
      %s51 = ssub.s32 %s38, %s45
      %s52 = sor.u32 %s50, %s51
      %p53 = scmp.eq.s32.totalorder %s52, 0
      %s55 = sadd.s32 %s54, 1
      %s56 = scalar_select %p53, %s54, %s55
      %p59 = pneg %p53
      %p60 = scmp.eq.s32.totalorder %s30, 7
      %p61 = por %p59, %p60
      %p62 = scmp.ne.s32.totalorder %s54, %s57
      %p63 = scmp.eq.s32.totalorder %s30, 0
      %p64 = por %p62, %p63
      %p65 = scmp.ne.s32.totalorder %s54, %s57
      %p66 = scmp.eq.s32.totalorder %s35, 7
      %p67 = por %p65, %p66
      %p68 = scmp.ne.s32.totalorder %s57, %s58
      %p69 = scmp.eq.s32.totalorder %s35, 0
      %p70 = por %p68, %p69
      %p71 = scmp.ne.s32.totalorder %s57, %s58
      %p72 = scmp.eq.s32.totalorder %s36, 7
      %p73 = por %p71, %p72
      %p75 = scmp.ne.s32.totalorder %s58, %s74
      %p76 = scmp.eq.s32.totalorder %s36, 0
      %p77 = por %p75, %p76
      %s78 = ssub.s32 %s37, %s49
      %s79 = ssub.s32 %s38, %s45
      %s80 = sor.u32 %s78, %s79
      %p81 = scmp.eq.s32.totalorder %s80, 0
      %s83 = sadd.s32 %s82, 1
      %s84 = scalar_select %p81, %s82, %s83
      %p87 = pneg %p81
      %p88 = scmp.eq.s32.totalorder %s30, 7
      %p89 = por %p87, %p88
      %p90 = scmp.ne.s32.totalorder %s82, %s85
      %p91 = scmp.eq.s32.totalorder %s30, 0
      %p92 = por %p90, %p91
      %p93 = scmp.ne.s32.totalorder %s82, %s85
      %p94 = scmp.eq.s32.totalorder %s35, 7
      %p95 = por %p93, %p94
      %p96 = scmp.ne.s32.totalorder %s85, %s86
      %p97 = scmp.eq.s32.totalorder %s35, 0
      %p98 = por %p96, %p97
      %p99 = scmp.ne.s32.totalorder %s85, %s86
      %p100 = scmp.eq.s32.totalorder %s36, 7
      %p101 = por %p99, %p100
      %p103 = scmp.ne.s32.totalorder %s86, %s102
      %p104 = scmp.eq.s32.totalorder %s36, 0
      %p105 = por %p103, %p104
      %s106 = ssub.s32 %s37, %s49
      %s107 = ssub.s32 %s38, %s45
      %s108 = sor.u32 %s106, %s107
      %p109 = scmp.eq.s32.totalorder %s108, 0
      %s111 = sadd.s32 %s110, 1
      %s112 = scalar_select %p109, %s110, %s111
      %p115 = pneg %p109
      %p116 = scmp.eq.s32.totalorder %s30, 7
      %p117 = por %p115, %p116
      %p118 = scmp.ne.s32.totalorder %s110, %s113
      %p119 = scmp.eq.s32.totalorder %s30, 0
      %p120 = por %p118, %p119
      %p121 = scmp.ne.s32.totalorder %s110, %s113
      %p122 = scmp.eq.s32.totalorder %s35, 7
      %p123 = por %p121, %p122
      %p124 = scmp.ne.s32.totalorder %s113, %s114
      %p125 = scmp.eq.s32.totalorder %s35, 0
      %p126 = por %p124, %p125
      %p127 = scmp.ne.s32.totalorder %s113, %s114
      %p128 = scmp.eq.s32.totalorder %s36, 7
      %p129 = por %p127, %p128
      %p131 = scmp.ne.s32.totalorder %s114, %s130
      %p132 = scmp.eq.s32.totalorder %s36, 0
      %p133 = por %p131, %p132
      %s134 = ssub.s32 %s38, %s45
      %p135 = scmp.eq.s32.totalorder %s134, 0
      %s137 = sadd.s32 %s136, 1
      %s138 = scalar_select %p135, %s136, %s137
      %p141 = pneg %p135
      %p142 = scmp.eq.s32.totalorder %s30, 7
      %p143 = por %p141, %p142
      %p144 = scmp.ne.s32.totalorder %s136, %s139
      %p145 = scmp.eq.s32.totalorder %s30, 0
      %p146 = por %p144, %p145
      %p147 = scmp.ne.s32.totalorder %s136, %s139
      %p148 = scmp.eq.s32.totalorder %s35, 7
      %p149 = por %p147, %p148
      %p150 = scmp.ne.s32.totalorder %s139, %s140
      %p151 = scmp.eq.s32.totalorder %s35, 0
      %p152 = por %p150, %p151
      %p153 = scmp.ne.s32.totalorder %s139, %s140
      %p154 = scmp.eq.s32.totalorder %s36, 7
      %p155 = por %p153, %p154
      %p157 = scmp.ne.s32.totalorder %s140, %s156
      %p158 = scmp.eq.s32.totalorder %s36, 0
      %p159 = por %p157, %p158
      %s161 = sadd.s32 %s160, 1
      %p164 = scmp.eq.s32.totalorder %s30, 7
      %p165 = scmp.ne.s32.totalorder %s160, %s162
      %p166 = scmp.eq.s32.totalorder %s30, 0
      %p167 = por %p165, %p166
      %p168 = scmp.ne.s32.totalorder %s160, %s162
      %p169 = scmp.eq.s32.totalorder %s35, 7
      %p170 = por %p168, %p169
      %p171 = scmp.ne.s32.totalorder %s162, %s163
      %p172 = scmp.eq.s32.totalorder %s35, 0
      %p173 = por %p171, %p172
      %p174 = scmp.ne.s32.totalorder %s162, %s163
      %p175 = scmp.eq.s32.totalorder %s36, 7
      %p176 = por %p174, %p175
      %p178 = scmp.ne.s32.totalorder %s163, %s177
      %p179 = scmp.eq.s32.totalorder %s36, 0
      %p180 = por %p178, %p179
      %s182 = sadd.s32 %s181, 1
      %p185 = scmp.eq.s32.totalorder %s30, 7
      %p186 = scmp.ne.s32.totalorder %s181, %s183
      %p187 = scmp.eq.s32.totalorder %s30, 0
      %p188 = por %p186, %p187
      %p189 = scmp.ne.s32.totalorder %s181, %s183
      %p190 = scmp.eq.s32.totalorder %s35, 7
      %p191 = por %p189, %p190
      %p192 = scmp.ne.s32.totalorder %s183, %s184
      %p193 = scmp.eq.s32.totalorder %s35, 0
      %p194 = por %p192, %p193
      %p195 = scmp.ne.s32.totalorder %s183, %s184
      %p196 = scmp.eq.s32.totalorder %s36, 7
      %p197 = por %p195, %p196
      %p199 = scmp.ne.s32.totalorder %s184, %s198
      %p200 = scmp.eq.s32.totalorder %s36, 0
      %p201 = por %p199, %p200
      %s202 = ssub.s32 %s37, %s49
      %p203 = scmp.eq.s32.totalorder %s202, 0
      %s205 = sadd.s32 %s204, 1
      %s206 = scalar_select %p203, %s204, %s205
      %p209 = pneg %p203
      %p210 = scmp.eq.s32.totalorder %s30, 7
      %p211 = por %p209, %p210
      %p212 = scmp.ne.s32.totalorder %s204, %s207
      %p213 = scmp.eq.s32.totalorder %s30, 0
      %p214 = por %p212, %p213
      %p215 = scmp.ne.s32.totalorder %s204, %s207
      %p216 = scmp.eq.s32.totalorder %s35, 7
      %p217 = por %p215, %p216
      %p218 = scmp.ne.s32.totalorder %s207, %s208
      %p219 = scmp.eq.s32.totalorder %s35, 0
      %p220 = por %p218, %p219
      %p221 = scmp.ne.s32.totalorder %s207, %s208
      %p222 = scmp.eq.s32.totalorder %s36, 7
      %p223 = por %p221, %p222
      %p225 = scmp.ne.s32.totalorder %s208, %s224
      %p226 = scmp.eq.s32.totalorder %s36, 0
      %p227 = por %p225, %p226
      %s228 = ssub.s32 %s37, %s49
      %s229 = ssub.s32 %s38, %s45
      %s230 = sor.u32 %s228, %s229
      %p231 = scmp.eq.s32.totalorder %s230, 0
      %s233 = sadd.s32 %s232, 1
      %s234 = scalar_select %p231, %s232, %s233
      %p237 = pneg %p231
      %p238 = scmp.eq.s32.totalorder %s30, 7
      %p239 = por %p237, %p238
      %p240 = scmp.ne.s32.totalorder %s232, %s235
      %p241 = scmp.eq.s32.totalorder %s30, 0
      %p242 = por %p240, %p241
      %p243 = scmp.ne.s32.totalorder %s232, %s235
      %p244 = scmp.eq.s32.totalorder %s35, 7
      %p245 = por %p243, %p244
      %p246 = scmp.ne.s32.totalorder %s235, %s236
      %p247 = scmp.eq.s32.totalorder %s35, 0
      %p248 = por %p246, %p247
      %p249 = scmp.ne.s32.totalorder %s235, %s236
      %p250 = scmp.eq.s32.totalorder %s36, 7
      %p251 = por %p249, %p250
      %p253 = scmp.ne.s32.totalorder %s236, %s252
      %p254 = scmp.eq.s32.totalorder %s36, 0
      %p255 = por %p253, %p254
      %s256 = ssub.s32 %s37, %s49
      %p257 = scmp.eq.s32.totalorder %s256, 0
      %s259 = sadd.s32 %s258, 1
      %s260 = scalar_select %p257, %s258, %s259
      %p263 = pneg %p257
      %p264 = scmp.eq.s32.totalorder %s30, 7
      %p265 = por %p263, %p264
      %p266 = scmp.ne.s32.totalorder %s258, %s261
      %p267 = scmp.eq.s32.totalorder %s30, 0
      %p268 = por %p266, %p267
      %p269 = scmp.ne.s32.totalorder %s258, %s261
      %p270 = scmp.eq.s32.totalorder %s35, 7
      %p271 = por %p269, %p270
      %p272 = scmp.ne.s32.totalorder %s261, %s262
      %p273 = scmp.eq.s32.totalorder %s35, 0
      %p274 = por %p272, %p273
      %p275 = scmp.ne.s32.totalorder %s261, %s262
      %p276 = scmp.eq.s32.totalorder %s36, 7
      %p277 = por %p275, %p276
      %p279 = scmp.ne.s32.totalorder %s262, %s278
      %p280 = scmp.eq.s32.totalorder %s36, 0
      %p281 = por %p279, %p280
      %p282 = scmp.le.s32.totalorder 1, %s30
      %p283 = scmp.lt.s32.totalorder %s30, 9
      %p284 = pnand %p282, %p283
      %p285 = pneg %p284
      // Predicated region
      $region9: #{tpu_custom_call.1} parent=5 // pred_check
        _
      $region10: #{tpu_custom_call.1} parent=5 // pred_check_branch
        %287 = sbr.rel (%p284) target = $region12
      $region11: #{tpu_custom_call.1} parent=5 // pred_region
        %s288 = ssub.s32 %s30, 1
        // Predicated region
        $region13: #{tpu_custom_call.1} parent=11 // pred_check
          %p289 = pneg %p173
        $region14: #{tpu_custom_call.1} parent=11 // pred_check_branch
          %291 = sbr.rel (%p289) target = $region16
        $region15: #{tpu_custom_call.1} parent=11 // pred_region
          _
        $region16: #{tpu_custom_call.1} parent=11 // pred_fallthru
          _
        // Predicated region
        $region17: #{tpu_custom_call.1} parent=11 // pred_check
          %p292 = pneg %p194
        $region18: #{tpu_custom_call.1} parent=11 // pred_check_branch
          %294 = sbr.rel (%p292) target = $region20
        $region19: #{tpu_custom_call.1} parent=11 // pred_region
          _
        $region20: #{tpu_custom_call.1} parent=11 // pred_fallthru
          _
      $region12: #{tpu_custom_call.1} parent=5 // pred_fallthru
        _
      %p295 = scmp.lt.s32.totalorder %s30, 8
      // Predicated region
      $region21: #{tpu_custom_call.1} parent=5 // pred_check
        %p296 = pneg %p295
      $region22: #{tpu_custom_call.1} parent=5 // pred_check_branch
        %298 = sbr.rel (%p296) target = $region24
      $region23: #{tpu_custom_call.1} parent=5 // pred_region
        // Predicated region
        $region25: #{tpu_custom_call.1} parent=23 // pred_check
          %p299 = pneg %p64
        $region26: #{tpu_custom_call.1} parent=23 // pred_check_branch
          %301 = sbr.rel (%p299) target = $region28
        $region27: #{tpu_custom_call.1} parent=23 // pred_region
          %s302 = sand.u32 %s54, 1
          %s303 = scalar_lea.sflag [#allocation3], %s302
          %s304 = sand.u32 %s54, 1
          %s305 = smul.addr %s304, 4
          %s306 = scalar_lea.vmem [#allocation2], %s305
          %s308 = ssub.s32 64, 64
          %309 = vsyncadd %s303, %s308
          %s310 = smul.addr %s37, 4
          %s311 = sadd.s32 %s38, %s310
          %s312 = smul.addr %s311, 64
          %s313 = scalar_lea.hbm %s0, %s312
          %s315 = sshll.u32 %s306, 4
          %s316 = int_to_ptr.vmem [resolvable:$true] %s315
          %318 = dma.hbm_to_vmem [thread:$0]  %s313, 64, %s316, %s303
        $region28: #{tpu_custom_call.1} parent=23 // pred_fallthru
          _
        // Predicated region
        $region29: #{tpu_custom_call.1} parent=23 // pred_check
          %p319 = pneg %p92
        $region30: #{tpu_custom_call.1} parent=23 // pred_check_branch
          %321 = sbr.rel (%p319) target = $region32
        $region31: #{tpu_custom_call.1} parent=23 // pred_region
          %s322 = sand.u32 %s30, 1
          %s323 = scalar_lea.sflag [#allocation6], %s322
          %s324 = sand.u32 %s82, 1
          %s325 = smul.addr %s324, 8
          %s326 = scalar_lea.vmem [#allocation5], %s325
          %s328 = ssub.s32 128, 128
          %329 = vsyncadd %s323, %s328
          %s330 = smul.addr %s37, 4
          %s331 = sadd.s32 %s38, %s330
          %s332 = smul.addr %s331, 128
          %s333 = scalar_lea.hbm %s1, %s332
          %s335 = sshll.u32 %s326, 4
          %s336 = int_to_ptr.vmem [resolvable:$true] %s335
          %338 = dma.hbm_to_vmem [thread:$0]  %s333, 128, %s336, %s323
        $region32: #{tpu_custom_call.1} parent=23 // pred_fallthru
          _
        // Predicated region
        $region33: #{tpu_custom_call.1} parent=23 // pred_check
          %p339 = pneg %p120
        $region34: #{tpu_custom_call.1} parent=23 // pred_check_branch
          %341 = sbr.rel (%p339) target = $region36
        $region35: #{tpu_custom_call.1} parent=23 // pred_region
          %s342 = sand.u32 %s30, 1
          %s343 = scalar_lea.sflag [#allocation6], %s342
          %s344 = sand.u32 %s110, 1
          %s345 = smul.addr %s344, 8
          %s346 = scalar_lea.vmem [#allocation7], %s345
          %s348 = ssub.s32 128, 128
          %349 = vsyncadd %s343, %s348
          %s350 = smul.addr %s37, 4
          %s351 = sadd.s32 %s38, %s350
          %s352 = smul.addr %s351, 128
          %s353 = scalar_lea.hbm %s2, %s352
          %s355 = sshll.u32 %s346, 4
          %s356 = int_to_ptr.vmem [resolvable:$true] %s355
          %358 = dma.hbm_to_vmem [thread:$0]  %s353, 128, %s356, %s343
        $region36: #{tpu_custom_call.1} parent=23 // pred_fallthru
          _
        // Predicated region
        $region37: #{tpu_custom_call.1} parent=23 // pred_check
          %p359 = pneg %p146
        $region38: #{tpu_custom_call.1} parent=23 // pred_check_branch
          %361 = sbr.rel (%p359) target = $region40
        $region39: #{tpu_custom_call.1} parent=23 // pred_region
          %s362 = sand.u32 %s136, 1
          %s363 = scalar_lea.sflag [#allocation9], %s362
          %s364 = sand.u32 %s136, 1
          %s365 = smul.addr %s364, 8
          %s366 = scalar_lea.vmem [#allocation8], %s365
          %s368 = ssub.s32 128, 128
          %369 = vsyncadd %s363, %s368
          %s370 = smul.addr %s38, 128
          %s371 = scalar_lea.hbm %s3, %s370
          %s373 = sshll.u32 %s366, 4
          %s374 = int_to_ptr.vmem [resolvable:$true] %s373
          %376 = dma.hbm_to_vmem [thread:$0]  %s371, 128, %s374, %s363
        $region40: #{tpu_custom_call.1} parent=23 // pred_fallthru
          _
        // Predicated region
        $region41: #{tpu_custom_call.1} parent=23 // pred_check
          %p377 = pneg %p214
        $region42: #{tpu_custom_call.1} parent=23 // pred_check_branch
          %379 = sbr.rel (%p377) target = $region44
        $region43: #{tpu_custom_call.1} parent=23 // pred_region
          %p380 = scmp.lt.s32.totalorder %s37, 1
          %s381 = scalar_select %p380, %s37, 1
          %s382 = smul.addr %s381, 4
          %s383 = scalar_lea.vmem %s6, %s382
        $region44: #{tpu_custom_call.1} parent=23 // pred_fallthru
          _
      $region24: #{tpu_custom_call.1} parent=5 // pred_fallthru
        _
      %p384 = scmp.le.s32.totalorder 1, %s30
      %p385 = scmp.lt.s32.totalorder %s30, 9
      %p386 = pnand %p384, %p385
      %p387 = pneg %p386
      // Predicated region
      $region45: #{tpu_custom_call.1} parent=5 // pred_check
        _
      $region46: #{tpu_custom_call.1} parent=5 // pred_check_branch
        %389 = sbr.rel (%p386) target = $region48
      $region47: #{tpu_custom_call.1} parent=5 // pred_region
        %s390 = ssub.s32 %s30, 1
        %s391 = sand.u32 %s57, 1
        %s392 = scalar_lea.sflag [#allocation3], %s391
        %s393 = sand.u32 %s57, 1
        %s394 = smul.addr %s393, 4
        %s395 = scalar_lea.vmem [#allocation2], %s394
        // Predicated region
        $region49: #{tpu_custom_call.1} parent=47 // pred_check
          %p396 = pneg %p70
        $region50: #{tpu_custom_call.1} parent=47 // pred_check_branch
          %398 = sbr.rel (%p396) target = $region52
        $region51: #{tpu_custom_call.1} parent=47 // pred_region
          %399 = dma.done %s392, 64
        $region52: #{tpu_custom_call.1} parent=47 // pred_fallthru
          _
        %s400 = sand.u32 %s35, 1
        %s401 = scalar_lea.sflag [#allocation6], %s400
        %s402 = sand.u32 %s85, 1
        %s403 = smul.addr %s402, 8
        %s404 = scalar_lea.vmem [#allocation5], %s403
        // Predicated region
        $region53: #{tpu_custom_call.1} parent=47 // pred_check
          %p405 = pneg %p98
        $region54: #{tpu_custom_call.1} parent=47 // pred_check_branch
          %407 = sbr.rel (%p405) target = $region56
        $region55: #{tpu_custom_call.1} parent=47 // pred_region
          %408 = dma.done %s401, 128
        $region56: #{tpu_custom_call.1} parent=47 // pred_fallthru
          _
        %s409 = sand.u32 %s35, 1
        %s410 = scalar_lea.sflag [#allocation6], %s409
        %s411 = sand.u32 %s113, 1
        %s412 = smul.addr %s411, 8
        %s413 = scalar_lea.vmem [#allocation7], %s412
        // Predicated region
        $region57: #{tpu_custom_call.1} parent=47 // pred_check
          %p414 = pneg %p126
        $region58: #{tpu_custom_call.1} parent=47 // pred_check_branch
          %416 = sbr.rel (%p414) target = $region60
        $region59: #{tpu_custom_call.1} parent=47 // pred_region
          %417 = dma.done %s410, 128
        $region60: #{tpu_custom_call.1} parent=47 // pred_fallthru
          _
        %s418 = sand.u32 %s139, 1
        %s419 = scalar_lea.sflag [#allocation9], %s418
        %s420 = sand.u32 %s139, 1
        %s421 = smul.addr %s420, 8
        %s422 = scalar_lea.vmem [#allocation8], %s421
        // Predicated region
        $region61: #{tpu_custom_call.1} parent=47 // pred_check
          %p423 = pneg %p152
        $region62: #{tpu_custom_call.1} parent=47 // pred_check_branch
          %425 = sbr.rel (%p423) target = $region64
        $region63: #{tpu_custom_call.1} parent=47 // pred_region
          %426 = dma.done %s419, 128
        $region64: #{tpu_custom_call.1} parent=47 // pred_fallthru
          _
        %s427 = sand.u32 %s57, 1
        %s428 = scalar_lea.sflag [#allocation3], %s427
        %s429 = sand.u32 %s57, 1
        %s430 = smul.addr %s429, 4
        %s431 = scalar_lea.vmem [#allocation2], %s430
        %p432 = pneg %p70
        %p433 = pneg %p67
        %s434 = sand.u32 %s35, 1
        %s435 = scalar_lea.sflag [#allocation6], %s434
        %s436 = sand.u32 %s85, 1
        %s437 = smul.addr %s436, 8
        %s438 = scalar_lea.vmem [#allocation5], %s437
        %p439 = pneg %p98
        %p440 = pneg %p95
        %s441 = sand.u32 %s35, 1
        %s442 = scalar_lea.sflag [#allocation6], %s441
        %s443 = sand.u32 %s113, 1
        %s444 = smul.addr %s443, 8
        %s445 = scalar_lea.vmem [#allocation7], %s444
        %p446 = pneg %p126
        %p447 = pneg %p123
        %s448 = sand.u32 %s139, 1
        %s449 = scalar_lea.sflag [#allocation9], %s448
        %s450 = sand.u32 %s139, 1
        %s451 = smul.addr %s450, 8
        %s452 = scalar_lea.vmem [#allocation8], %s451
        %p453 = pneg %p152
        %p454 = pneg %p149
        %p455 = pneg %p173
        %p456 = pneg %p170
        %p457 = pneg %p194
        %p458 = pneg %p191
        %p459 = scmp.lt.s32.totalorder %s39, 1
        %s460 = scalar_select %p459, %s39, 1
        %s461 = smul.addr %s460, 4
        %s462 = scalar_lea.vmem %s6, %s461
        %p463 = pneg %p220
        %p464 = pneg %p217
        %p465 = pneg %p248
        %p466 = pneg %p245
        %s467 = sand.u32 %s235, 1
        %s468 = scalar_lea.sflag [#allocation4], %s467
        %s469 = sand.u32 %s235, 1
        %s470 = smul.addr %s469, 4
        %s471 = scalar_lea.vmem [#allocation10], %s470
        %p472 = pneg %p274
        %p473 = pneg %p271
        %s474 = sand.u32 %s261, 1
        %s475 = scalar_lea.sflag [#allocation12], %s474
        %s476 = sand.u32 %s261, 1
        %s477 = smul.addr %s476, 4
        %s478 = scalar_lea.vmem [#allocation11], %s477
        %p479 = scmp.lt.s32.totalorder %s39, 1
        %s480 = scalar_select %p479, %s39, 1
        %s481 = smul.addr %s480, 4
        %s482 = scalar_lea.vmem %s6, %s481
        %s484 = scalar_lea.vmem %s4, %s40
        %v485 = vld [vmem:[%s484] sm:$0x1]
        %s486 = scalar_lea.vmem %s5, %s40
        %v487 = vld [vmem:[%s486] sm:$0x1]
        %v488 = vld [vmem:[%s395] sm:$0xf]
        %v489 = vlaneseq
        %v490 = vshrl.u32 %v489, 7
        %v491 = vsub.s32 0, %v490
        %v492 = vrot.slane %v485, %v491
        %v493 = vadd.f32 %v488, %v492
        %v494 = vpack.c.bf16 %v493, %v493
        %v495 = vlaneseq
        %v496 = vshrl.u32 %v495, 7
        %v497 = vsub.s32 0, %v496
        %v498 = vrot.slane %v487, %v497
        %v499 = vadd.f32 %v488, %v498
        %v500 = vpack.c.bf16 %v499, %v499
        %v501 = vld [vmem:[%s404] sm:$0xff]
        %v502 = vpack.c.bf16 %v501, %v501
        %v503 = vld [vmem:[%s422] sm:$0xff]
        %v504 = vpack.c.bf16 %v503, %v503
        %vm505 = vcmask 64512
        %v507 = vsel %vm505, %v500, 0
        %v510 = vsel %vm505, %v504, 0
        %512 = vmatprep.subr.bf16.mxu0 0
        %513 = vmatpush1.bf16.xpose.msra.mxu0 %v510
        %514 = vmatprep.subr.bf16.mxu0 0
        %515 = vmatpush1.bf16.xpose.msra.mxu0 0
        %516 = vmatprep.subr.bf16.mxu0 0
        %517 = vmatpush1.bf16.xpose.msra.mxu0 0
        %518 = vmatprep.subr.bf16.mxu0 0
        %519 = vmatpush1.bf16.xpose.msra.mxu0 0
        %520 = vmatprep.subr.bf16.mxu0 0
        %521 = vmatpush1.bf16.xpose.msra.mxu0 0
        %522 = vmatprep.subr.bf16.mxu0 0
        %523 = vmatpush1.bf16.xpose.msra.mxu0 0
        %524 = vmatprep.subr.bf16.mxu0 0
        %525 = vmatpush1.bf16.xpose.msra.mxu0 0
        %526 = vmatprep.subr.bf16.mxu0 0
        %527 = vmatpush1.bf16.xpose.msra.mxu0 0
        %528 = vmatprep.subr.bf16.mxu0 0
        %529 = vmatpush1.bf16.xpose.msra.mxu0 0
        %530 = vmatprep.subr.bf16.mxu0 0
        %531 = vmatpush1.bf16.xpose.msra.mxu0 0
        %532 = vmatprep.subr.bf16.mxu0 0
        %533 = vmatpush1.bf16.xpose.msra.mxu0 0
        %534 = vmatprep.subr.bf16.mxu0 0
        %535 = vmatpush1.bf16.xpose.msra.mxu0 0
        %536 = vmatprep.subr.bf16.mxu0 0
        %537 = vmatpush1.bf16.xpose.msra.mxu0 0
        %538 = vmatprep.subr.bf16.mxu0 0
        %539 = vmatpush1.bf16.xpose.msra.mxu0 0
        %540 = vmatprep.subr.bf16.mxu0 0
        %541 = vmatpush1.bf16.xpose.msra.mxu0 0
        %542 = vmatprep.subr.bf16.mxu0 0
        %543 = vmatpush1.bf16.xpose.msra.mxu0 0
        %544 = vmatprep.mubr.bf16.mxu0 0
        %545 = vmatmul.mubr.bf16.gmra.mrb[0].mxu0 %v507
        %v546 = vpop.f32.mrb[0].mxu0
        %v547 = vadd.f32 0.0, %v546
        %v548 = vpop.f32.mrb[0].mxu0
        %v549 = vpop.f32.mrb[0].mxu0
        %v550 = vpop.f32.mrb[0].mxu0
        %551 = vdwg.mxu0
        %553 = vrot.lane.b32.xlu0 %v547, 125
        %v554 = vpop.permute.xlu0 %553
        %v556 = vrot.slane %v547, 1
        %557 = vrot.lane.b32.xlu0 %v556, 6
        %v558 = vpop.permute.xlu0 %557
        %vm560 = vcmask 39936
        %v561 = vsel %vm560, %v554, 0.0
        %vm562 = vcmask 48128
        %v563 = vsel %vm562, %v561, %v558
        %564 = vrot.lane.b32.xlu0 %v547, 126
        %v565 = vpop.permute.xlu0 %564
        %567 = vrot.lane.b32.xlu0 %v556, 7
        %v568 = vpop.permute.xlu0 %567
        %v570 = vsel %vm562, %v565, 0.0
        %vm571 = vcmask 56320
        %v572 = vsel %vm571, %v570, %v568
        %573 = vrot.lane.b32.xlu0 %v547, 127
        %v574 = vpop.permute.xlu0 %573
        %v576 = vsel %vm571, %v574, 0.0
        %vm577 = vcmask 1040384
        %v578 = vsel %vm577, %v563, %v572
        %vm579 = vcmask 1041408
        %v580 = vsel %vm579, %v578, %v576
        %vm581 = vcmask 1042432
        %v582 = vsel %vm581, %v580, %v547
        %v584 = vsel %vm505, %v494, 0
        %v587 = vsel %vm505, %v502, 0
        %589 = vmatprep.subr.bf16.mxu0 0
        %590 = vmatpush1.bf16.xpose.msra.mxu0 %v587
        %591 = vmatprep.subr.bf16.mxu0 0
        %592 = vmatpush1.bf16.xpose.msra.mxu0 0
        %593 = vmatprep.subr.bf16.mxu0 0
        %594 = vmatpush1.bf16.xpose.msra.mxu0 0
        %595 = vmatprep.subr.bf16.mxu0 0
        %596 = vmatpush1.bf16.xpose.msra.mxu0 0
        %597 = vmatprep.subr.bf16.mxu0 0
        %598 = vmatpush1.bf16.xpose.msra.mxu0 0
        %599 = vmatprep.subr.bf16.mxu0 0
        %600 = vmatpush1.bf16.xpose.msra.mxu0 0
        %601 = vmatprep.subr.bf16.mxu0 0
        %602 = vmatpush1.bf16.xpose.msra.mxu0 0
        %603 = vmatprep.subr.bf16.mxu0 0
        %604 = vmatpush1.bf16.xpose.msra.mxu0 0
        %605 = vmatprep.subr.bf16.mxu0 0
        %606 = vmatpush1.bf16.xpose.msra.mxu0 0
        %607 = vmatprep.subr.bf16.mxu0 0
        %608 = vmatpush1.bf16.xpose.msra.mxu0 0
        %609 = vmatprep.subr.bf16.mxu0 0
        %610 = vmatpush1.bf16.xpose.msra.mxu0 0
        %611 = vmatprep.subr.bf16.mxu0 0
        %612 = vmatpush1.bf16.xpose.msra.mxu0 0
        %613 = vmatprep.subr.bf16.mxu0 0
        %614 = vmatpush1.bf16.xpose.msra.mxu0 0
        %615 = vmatprep.subr.bf16.mxu0 0
        %616 = vmatpush1.bf16.xpose.msra.mxu0 0
        %617 = vmatprep.subr.bf16.mxu0 0
        %618 = vmatpush1.bf16.xpose.msra.mxu0 0
        %619 = vmatprep.subr.bf16.mxu0 0
        %620 = vmatpush1.bf16.xpose.msra.mxu0 0
        %621 = vmatprep.mubr.bf16.mxu0 0
        %622 = vmatmul.mubr.bf16.gmra.mrb[0].mxu0 %v584
        %v623 = vpop.f32.mrb[0].mxu0
        %v624 = vadd.f32 %v582, %v623
        %v625 = vpop.f32.mrb[0].mxu0
        %v626 = vpop.f32.mrb[0].mxu0
        %v627 = vpop.f32.mrb[0].mxu0
        %628 = vdwg.mxu0
        %v629 = vmul.f32 %v624, 0.35355338
        %v630 = vtanh.pop %v629
        %v631 = vmul.f32 %v630, 5.0
        %vm632 = vcmask 60416
        %v633 = vsel %vm632, %v631, -inf
        %634 = vmax.xlane.f32.xlu0 %v633
        %v635 = vpop.xlane.xlu0 %634
        %v636 = vsub.f32 %v631, %v635
        %v637 = vmul.f32 %v636, 1.442695
        %v638 = vpow.pop %v637
        %v639 = vsel %vm632, %v638, 0.0
        %640 = vadd.xlane.f32.xlu0 %v639
        %v641 = vpop.xlane.xlu0 %640
        %v642 = vrcp.pop %v641
        %v643 = vmul.f32 %v638, %v642
        %v644 = vpack.c.bf16 %v643, %v643
        %v645 = vld [vmem:[%s413] sm:$0xff]
        %v646 = vpack.c.bf16 %v645, %v645
        %v648 = vsel %vm505, %v644, 0
        %vm650 = vcmask 1043456
        %v652 = vsel %vm650, %v646, 0
        %654 = vmatprep.subr.bf16.mxu0 0
        %655 = vmatpush1.bf16.msra.mxu0 %v652
        %656 = vmatprep.subr.bf16.mxu0 0
        %657 = vmatpush1.bf16.msra.mxu0 0
        %658 = vmatprep.subr.bf16.mxu0 0
        %659 = vmatpush1.bf16.msra.mxu0 0
        %660 = vmatprep.subr.bf16.mxu0 0
        %661 = vmatpush1.bf16.msra.mxu0 0
        %662 = vmatprep.subr.bf16.mxu0 0
        %663 = vmatpush1.bf16.msra.mxu0 0
        %664 = vmatprep.subr.bf16.mxu0 0
        %665 = vmatpush1.bf16.msra.mxu0 0
        %666 = vmatprep.subr.bf16.mxu0 0
        %667 = vmatpush1.bf16.msra.mxu0 0
        %668 = vmatprep.subr.bf16.mxu0 0
        %669 = vmatpush1.bf16.msra.mxu0 0
        %670 = vmatprep.subr.bf16.mxu0 0
        %671 = vmatpush1.bf16.msra.mxu0 0
        %672 = vmatprep.subr.bf16.mxu0 0
        %673 = vmatpush1.bf16.msra.mxu0 0
        %674 = vmatprep.subr.bf16.mxu0 0
        %675 = vmatpush1.bf16.msra.mxu0 0
        %676 = vmatprep.subr.bf16.mxu0 0
        %677 = vmatpush1.bf16.msra.mxu0 0
        %678 = vmatprep.subr.bf16.mxu0 0
        %679 = vmatpush1.bf16.msra.mxu0 0
        %680 = vmatprep.subr.bf16.mxu0 0
        %681 = vmatpush1.bf16.msra.mxu0 0
        %682 = vmatprep.subr.bf16.mxu0 0
        %683 = vmatpush1.bf16.msra.mxu0 0
        %684 = vmatprep.subr.bf16.mxu0 0
        %685 = vmatpush1.bf16.msra.mxu0 0
        %686 = vmatprep.mubr.bf16.mxu0 0
        %687 = vmatmul.mubr.bf16.gmra.mrb[0].mxu0 %v648
        %v688 = vpop.f32.mrb[0].mxu0
        %v689 = vadd.f32 0.0, %v688
        %v690 = vpop.f32.mrb[0].mxu0
        %v691 = vpop.f32.mrb[0].mxu0
        %v692 = vpop.f32.mrb[0].mxu0
        %693 = vdwg.mxu0
        %694 = vst.msk [vmem:[%s471] sm:$0xf] %vm632, %v689
        %p695 = scmp.eq.s32.totalorder %s40, 0
        // Predicated region
        $region65: #{tpu_custom_call.1} parent=47 // pred_check
          %p696 = pneg %p695
        $region66: #{tpu_custom_call.1} parent=47 // pred_check_branch
          %698 = sbr.rel (%p696) target = $region68
        $region67: #{tpu_custom_call.1} parent=47 // pred_region
          %699 = vst.msk [vmem:[%s478] sm:$0xf] %vm632, %v631
        $region68: #{tpu_custom_call.1} parent=47 // pred_fallthru
          _
        %p700 = scmp.ne.s32.totalorder %s40, 0
        // Predicated region
        $region69: #{tpu_custom_call.1} parent=47 // pred_check
          %p701 = pneg %p700
        $region70: #{tpu_custom_call.1} parent=47 // pred_check_branch
          %703 = sbr.rel (%p701) target = $region72
        $region71: #{tpu_custom_call.1} parent=47 // pred_region
          %v704 = vld [vmem:[%s478] sm:$0xf]
          %v705 = vadd.f32 %v704, %v631
          %706 = vst.msk [vmem:[%s478] sm:$0xf] %vm632, %v705
        $region72: #{tpu_custom_call.1} parent=47 // pred_fallthru
          _
        %p707 = scmp.eq.s32.totalorder %s40, 3
        // Predicated region
        $region73: #{tpu_custom_call.1} parent=47 // pred_check
          %p708 = pneg %p707
        $region74: #{tpu_custom_call.1} parent=47 // pred_check_branch
          %710 = sbr.rel (%p708) target = $region76
        $region75: #{tpu_custom_call.1} parent=47 // pred_region
          %v711 = vld [vmem:[%s478] sm:$0xf]
          %v712 = vmul.f32 %v711, 0.25
          %v713 = vld [vmem:[%s482] sm:$0xf]
          %vm714 = vcmp.gt.f32.partialorder %v713, 0.5
          %v715 = vsel %vm714, -inf, %v712
          %v716 = vsel %vm632, %v715, -inf
          %717 = vmax.xlane.f32.xlu0 %v716
          %v718 = vpop.xlane.xlu0 %717
          %v719 = vsub.f32 %v715, %v718
          %v720 = vmul.f32 %v719, 1.442695
          %v721 = vpow.pop %v720
          %v722 = vsel %vm632, %v721, 0.0
          %723 = vadd.xlane.f32.xlu0 %v722
          %v724 = vpop.xlane.xlu0 %723
          %v725 = vrcp.pop %v724
          %v726 = vmul.f32 %v721, %v725
          %727 = vst.msk [vmem:[%s478] sm:$0xf] %vm632, %v726
        $region76: #{tpu_custom_call.1} parent=47 // pred_fallthru
          _
        %s728 = sand.u32 %s235, 1
        %s729 = scalar_lea.sflag [#allocation4], %s728
        %s730 = sand.u32 %s235, 1
        %s731 = smul.addr %s730, 4
        %s732 = scalar_lea.vmem [#allocation10], %s731
        %s733 = sand.u32 %s261, 1
        %s734 = scalar_lea.sflag [#allocation12], %s733
        %s735 = sand.u32 %s261, 1
        %s736 = smul.addr %s735, 4
        %s737 = scalar_lea.vmem [#allocation11], %s736
        // Predicated region
        $region77: #{tpu_custom_call.1} parent=47 // pred_check
          %p738 = pneg %p245
        $region78: #{tpu_custom_call.1} parent=47 // pred_check_branch
          %740 = sbr.rel (%p738) target = $region80
        $region79: #{tpu_custom_call.1} parent=47 // pred_region
          %s742 = ssub.s32 64, 64
          %743 = vsyncadd %s729, %s742
          %s744 = smul.addr %s39, 4
          %s745 = sadd.s32 %s40, %s744
          %s746 = smul.addr %s745, 64
          %s747 = scalar_lea.hbm %s7, %s746
          %s749 = sshll.u32 %s732, 4
          %s750 = int_to_ptr.vmem [resolvable:$true] %s749
          %752 = dma.vmem_to_hbm [thread:$0]  %s750, 64, %s747, %s729
        $region80: #{tpu_custom_call.1} parent=47 // pred_fallthru
          _
        // Predicated region
        $region81: #{tpu_custom_call.1} parent=47 // pred_check
          %p753 = pneg %p271
        $region82: #{tpu_custom_call.1} parent=47 // pred_check_branch
          %755 = sbr.rel (%p753) target = $region84
        $region83: #{tpu_custom_call.1} parent=47 // pred_region
          %s757 = ssub.s32 64, 64
          %758 = vsyncadd %s734, %s757
          %s759 = smul.addr %s39, 64
          %s760 = scalar_lea.hbm %s8, %s759
          %s762 = sshll.u32 %s737, 4
          %s763 = int_to_ptr.vmem [resolvable:$true] %s762
          %765 = dma.vmem_to_hbm [thread:$0]  %s763, 64, %s760, %s734
        $region84: #{tpu_custom_call.1} parent=47 // pred_fallthru
          _
      $region48: #{tpu_custom_call.1} parent=5 // pred_fallthru
        _
      %p766 = scmp.le.s32.totalorder 2, %s30
      // Predicated region
      $region85: #{tpu_custom_call.1} parent=5 // pred_check
        %p767 = pneg %p766
      $region86: #{tpu_custom_call.1} parent=5 // pred_check_branch
        %769 = sbr.rel (%p767) target = $region88
      $region87: #{tpu_custom_call.1} parent=5 // pred_region
        %s770 = ssub.s32 %s30, 2
        // Predicated region
        $region89: #{tpu_custom_call.1} parent=87 // pred_check
          %p771 = pneg %p251
        $region90: #{tpu_custom_call.1} parent=87 // pred_check_branch
          %773 = sbr.rel (%p771) target = $region92
        $region91: #{tpu_custom_call.1} parent=87 // pred_region
          %s774 = sand.u32 %s236, 1
          %s775 = scalar_lea.sflag [#allocation4], %s774
          %s776 = sand.u32 %s236, 1
          %s777 = smul.addr %s776, 4
          %s778 = scalar_lea.vmem [#allocation10], %s777
          %779 = dma.done %s775, 64
        $region92: #{tpu_custom_call.1} parent=87 // pred_fallthru
          _
        // Predicated region
        $region93: #{tpu_custom_call.1} parent=87 // pred_check
          %p780 = pneg %p277
        $region94: #{tpu_custom_call.1} parent=87 // pred_check_branch
          %782 = sbr.rel (%p780) target = $region96
        $region95: #{tpu_custom_call.1} parent=87 // pred_region
          %s783 = sand.u32 %s262, 1
          %s784 = scalar_lea.sflag [#allocation12], %s783
          %s785 = sand.u32 %s262, 1
          %s786 = smul.addr %s785, 4
          %s787 = scalar_lea.vmem [#allocation11], %s786
          %788 = dma.done %s784, 64
        $region96: #{tpu_custom_call.1} parent=87 // pred_fallthru
          _
      $region88: #{tpu_custom_call.1} parent=5 // pred_fallthru
        _
    $region6: #{tpu_custom_call.1} parent=1 // loop_footer
      %s34 = sadd.s32 1, %s30
    $region7: #{tpu_custom_call.1} parent=1 // loop_footer_branch
      %29 = sbr.rel target = $region3
    $region8: #{tpu_custom_call.1} parent=1 // loop_exit
      _
    %789 = vsyncpa [#allocation3], 1
    %s790 = scalar_lea.sflag [#allocation3], 1
    %791 = vsyncpa %s790, 1
    %792 = vsyncpa [#allocation6], 1
    %s793 = scalar_lea.sflag [#allocation6], 1
    %794 = vsyncpa %s793, 1
    %795 = vsyncpa [#allocation9], 1
    %s796 = scalar_lea.sflag [#allocation9], 1
    %797 = vsyncpa %s796, 1
    %798 = vsyncpa [#allocation4], 1
    %s799 = scalar_lea.sflag [#allocation4], 1
    %800 = vsyncpa %s799, 1
    %801 = vsyncpa [#allocation12], 1
    %s802 = scalar_lea.sflag [#allocation12], 1
    %803 = vsyncpa %s802, 1

</llo_original>
